<compile_context>
chip_gen: v5e
topology: v5e:2x2
jax: 0.10.0
libtpu: 0.0.40
codegen_flags: <defaults>
</compile_context>

<pallas_src>
import functools

import jax
import jax.numpy as jnp
from jax.experimental import pallas as pl
from jax.experimental.pallas import tpu as pltpu


_LANE = 128
_SUB = 8                # f32 sublane granularity
_MAX_TB = 4096          # keeps per-step DMA >= ~4 MiB even at C = 128 f32
_WORK_F32 = 7           # conservative count of live f32 temporaries per element


def _round_up(x, m):
    return ((x + m - 1) // m) * m


def _vmem_capacity_bytes():
    try:
        return int(pltpu.get_tpu_info().vmem_capacity_bytes)
    except Exception:
        return 64 << 20  # conservative fallback (v7x-sized VMEM)


def _distill_kernel(s_ref, t_ref, o_ref, *, inv_temperature, batch, tile_b,
                    need_row_mask):
    """One grid step over a (tb, C) tile of student/teacher logits.

    Writes an (8, C) lane-dense partial whose total sum equals this tile's
    contribution to sum_rows KL(p_t || p_s) (with 1/T already folded in)."""
    s = s_ref[...].astype(jnp.float32)
    t = t_ref[...].astype(jnp.float32)
    tb, c = s.shape

    if need_row_mask:
        # Ragged batch tail: rows past `batch` hold unspecified data.  Forcing
        # student == teacher == 0 on those rows makes both their elementwise KL
        # and their per-row constants exactly zero (identical math both sides).
        row = jax.lax.broadcasted_iota(jnp.int32, (tb, c), 0)
        valid = (pl.program_id(0) * tile_b + row) < batch
        s = jnp.where(valid, s, 0.0)
        t = jnp.where(valid, t, 0.0)

    inv_t = jnp.float32(inv_temperature)
    # Fold 1/T into the max-shift (argmax is invariant to a positive scale).
    s_shift = (s - jnp.max(s, axis=1, keepdims=True)) * inv_t
    t_shift = (t - jnp.max(t, axis=1, keepdims=True)) * inv_t

    # Two full-tile exps total (EUP); sums feed the per-row constants / p_t.
    e_s = jnp.exp(s_shift)
    e_t = jnp.exp(t_shift)
    sum_s = jnp.sum(e_s, axis=1, keepdims=True)
    sum_t = jnp.sum(e_t, axis=1, keepdims=True)

    # Exact per-row reciprocal (per review: approx error isn't worth it here,
    # the reciprocal is only (tb, 1)).
    p_t = e_t * pl.reciprocal(sum_t, approx=False)

    # KL rewrite: sum_c p_t*(log p_t - log p_s)
    #   = sum_c p_t*(t_shift - s_shift) + (log sum_s - log sum_t)   per row.
    kl = p_t * (t_shift - s_shift)                    # (tb, C) full-tile work
    row_const = jnp.log(sum_s) - jnp.log(sum_t)       # (tb, 1) per-row work
    const_sum = jnp.sum(row_const)                    # scalar

    # Lane-dense partial: cross-sublane reduce (XLU slot, hidden under the DMA),
    # with the per-row constants folded into lane 0 of the row sum.
    lane0 = jax.lax.broadcasted_iota(jnp.int32, (1, c), 1) == 0
    ksum = jnp.sum(kl, axis=0, keepdims=True) + jnp.where(lane0, const_sum, 0.0)

    # Write a full (8, C) slab (unmasked stores; no sub-8 second-minor block):
    # partial in sublane 0, zeros elsewhere.  Wrapper sums everything anyway.
    sub0 = jax.lax.broadcasted_iota(jnp.int32, (_SUB, c), 0) == 0
    o_ref[...] = jnp.where(sub0, ksum, 0.0)


def _choose_tile_b(batch, classes, itemsize):
    """Largest 8-aligned batch tile whose full per-step working set
    (double-buffered inputs + f32 intermediates) fits a generation-aware VMEM
    budget, kept to >= 2 grid steps whenever the batch allows (v7x megacore)."""
    cp = _round_up(classes, _LANE)                 # physical lane padding
    cap = _vmem_capacity_bytes()
    budget = (72 << 20) if cap >= (96 << 20) else (40 << 20)

    bytes_per_row = 2 * 2 * cp * itemsize + _WORK_F32 * cp * 4
    tb = budget // max(bytes_per_row, 1)
    tb = max(_SUB, min(_MAX_TB, (tb // _SUB) * _SUB))

    if batch < _SUB:
        # Tiny batch: block second-minor == full array dim (allowed), one step.
        return batch, bytes_per_row

    # Keep the block shape inside the array; only the last step is ragged.
    tb = min(tb, (batch // _SUB) * _SUB)
    # Keep >= 2 grid steps whenever possible so the 'parallel' axis can be
    # split across v7x's two TensorCores.
    if batch >= 2 * _SUB:
        tb = min(tb, _round_up(-(-batch // 2), _SUB))
    return tb, bytes_per_row


def distillation_loss(outputs_student, outputs_teacher, temperature=1.0):
    assert outputs_student.shape == outputs_teacher.shape
    assert outputs_student.ndim == 2
    assert float(temperature) != 0.0
    B, C = outputs_student.shape
    itemsize = jnp.dtype(outputs_student.dtype).itemsize

    # TODO(synk): for very large class counts (C >~ 32k) a class-chunked
    # online-softmax (second 'arbitrary' grid axis with running max/sum) would
    # keep the per-step VMEM footprint independent of C; current version keeps
    # the whole class axis resident per step.
    tb, bytes_per_row = _choose_tile_b(B, C, itemsize)
    num_tiles = -(-B // tb)
    need_row_mask = (B % tb) != 0

    cp = _round_up(C, _LANE)
    cap = _vmem_capacity_bytes()
    # VMEM limit consistent with the budget used to pick tb (double-buffered
    # inputs + f32 temps + tiny output + headroom), kept under the chip's VMEM.
    needed = tb * bytes_per_row + 2 * _SUB * cp * 4 + (2 << 20)
    upper = max(16 << 20, cap - (8 << 20))
    vmem_limit = int(min(max(needed, 16 << 20), upper))

    cost = pl.CostEstimate(
        flops=10 * B * C,
        transcendentals=2 * B * C + 4 * B,
        bytes_accessed=2 * B * C * itemsize + num_tiles * _SUB * C * 4,
    )

    kernel = functools.partial(
        _distill_kernel,
        inv_temperature=1.0 / float(temperature),
        batch=B,
        tile_b=tb,
        need_row_mask=need_row_mask,
    )

    partials = pl.pallas_call(
        kernel,
        out_shape=jax.ShapeDtypeStruct((num_tiles * _SUB, C), jnp.float32),
        grid_spec=pltpu.PrefetchScalarGridSpec(
            num_scalar_prefetch=0,
            grid=(num_tiles,),
            in_specs=[
                pl.BlockSpec((tb, C), lambda i: (i, 0)),
                pl.BlockSpec((tb, C), lambda i: (i, 0)),
            ],
            out_specs=pl.BlockSpec((_SUB, C), lambda i: (i, 0)),
        ),
        compiler_params=pltpu.CompilerParams(
            dimension_semantics=("parallel",),   # disjoint outputs per step
            vmem_limit_bytes=vmem_limit,
        ),
        cost_estimate=cost,
    )(outputs_student, outputs_teacher)

    # 'batchmean' reduction (over the ORIGINAL batch) and * T**2 scaling.
    scale = jnp.float32(float(temperature) ** 2 / B)
    return jnp.sum(partials) * scale


def _reference_loss(outputs_student, outputs_teacher, temperature=1.0):
    # Pure-JAX reference matching the PyTorch module exactly.
    t = jnp.float32(temperature)
    log_p_t = jax.nn.log_softmax(outputs_teacher.astype(jnp.float32) / t, axis=1)
    log_p_s = jax.nn.log_softmax(outputs_student.astype(jnp.float32) / t, axis=1)
    p_t = jnp.exp(log_p_t)
    kl = jnp.sum(p_t * (log_p_t - log_p_s)) / outputs_student.shape[0]
    return kl * t * t


if __name__ == "__main__":
    key = jax.random.PRNGKey(0)
    k1, k2, k3, k4 = jax.random.split(key, 4)

    # Logits consistent with the module: batch=16, num_classes=128.
    B, C = 16, 128
    temperature = 2.0
    s = jax.random.normal(k1, (B, C), dtype=jnp.float32)
    t = jax.random.normal(k2, (B, C), dtype=jnp.float32)

    loss = jax.block_until_ready(distillation_loss(s, t, temperature))
    ref = _reference_loss(s, t, temperature)
    assert jnp.allclose(loss, ref, rtol=2e-3, atol=1e-5), (loss, ref)

    # Ragged case: non-lane-multiple C (100) and ragged batch tail (12 % 8 != 0),
    # both handled in-kernel with no wrapper-side padding copies.
    B2, C2 = 12, 100
    s2 = jax.random.normal(k3, (B2, C2), dtype=jnp.float32)
    t2 = jax.random.normal(k4, (B2, C2), dtype=jnp.float32)
    loss2 = jax.block_until_ready(distillation_loss(s2, t2, 1.5))
    ref2 = _reference_loss(s2, t2, 1.5)
    assert jnp.allclose(loss2, ref2, rtol=2e-3, atol=1e-5), (loss2, ref2)

    print("KERNEL_OK")
</pallas_src>

<mosaic_0001>
module attributes {stable_mosaic.version = 11 : i64} {
  func.func @_distill_kernel(%arg0: i32, %arg1: memref<8x128xf32, #tpu.memory_space<vmem>>, %arg2: memref<8x128xf32, #tpu.memory_space<vmem>>, %arg3: memref<8x128xf32, #tpu.memory_space<vmem>>) attributes {dimension_semantics = [#tpu.dimension_semantics<parallel>], iteration_bounds = array<i64: 2>, scalar_prefetch = 0 : i64, scratch_operands = 0 : i64, tpu.core_type = #tpu.core_type<tc>, window_params = [{transform_indices = @transform_0, window_bounds = array<i64: 8, 128>}, {transform_indices = @transform_1, window_bounds = array<i64: 8, 128>}, {transform_indices = @transform_2, window_bounds = array<i64: 8, 128>}]} {
    %c0 = arith.constant 0 : index
    %c0_0 = arith.constant 0 : index
    %0 = vector.load %arg1[%c0, %c0_0] : memref<8x128xf32, #tpu.memory_space<vmem>>, vector<8x128xf32>
    %c0_1 = arith.constant 0 : index
    %c0_2 = arith.constant 0 : index
    %1 = vector.load %arg2[%c0_1, %c0_2] : memref<8x128xf32, #tpu.memory_space<vmem>>, vector<8x128xf32>
    %cst = arith.constant dense<0xFF800000> : vector<8xf32>
    %2 = vector.multi_reduction <maximumf>, %0, %cst [1] : vector<8x128xf32> to vector<8xf32>
    %3 = vector.shape_cast %2 : vector<8xf32> to vector<8x1xf32>
    %4 = vector.broadcast %3 : vector<8x1xf32> to vector<8x128xf32>
    %5 = arith.subf %0, %4 : vector<8x128xf32>
    %cst_3 = arith.constant 5.000000e-01 : f32
    %6 = vector.broadcast %cst_3 : f32 to vector<8x128xf32>
    %7 = arith.mulf %5, %6 : vector<8x128xf32>
    %cst_4 = arith.constant dense<0xFF800000> : vector<8xf32>
    %8 = vector.multi_reduction <maximumf>, %1, %cst_4 [1] : vector<8x128xf32> to vector<8xf32>
    %9 = vector.shape_cast %8 : vector<8xf32> to vector<8x1xf32>
    %10 = vector.broadcast %9 : vector<8x1xf32> to vector<8x128xf32>
    %11 = arith.subf %1, %10 : vector<8x128xf32>
    %cst_5 = arith.constant 5.000000e-01 : f32
    %12 = vector.broadcast %cst_5 : f32 to vector<8x128xf32>
    %13 = arith.mulf %11, %12 : vector<8x128xf32>
    %14 = math.exp %7 : vector<8x128xf32>
    %15 = math.exp %13 : vector<8x128xf32>
    %cst_6 = arith.constant dense<0.000000e+00> : vector<8xf32>
    %16 = vector.multi_reduction <add>, %14, %cst_6 [1] : vector<8x128xf32> to vector<8xf32>
    %17 = vector.shape_cast %16 : vector<8xf32> to vector<8x1xf32>
    %cst_7 = arith.constant dense<0.000000e+00> : vector<8xf32>
    %18 = vector.multi_reduction <add>, %15, %cst_7 [1] : vector<8x128xf32> to vector<8xf32>
    %19 = vector.shape_cast %18 : vector<8xf32> to vector<8x1xf32>
    %20 = tpu.reciprocal %19 : vector<8x1xf32> -> vector<8x1xf32>
    %21 = vector.broadcast %20 : vector<8x1xf32> to vector<8x128xf32>
    %22 = arith.mulf %15, %21 : vector<8x128xf32>
    %23 = arith.subf %13, %7 : vector<8x128xf32>
    %24 = arith.mulf %22, %23 : vector<8x128xf32>
    %25 = math.log %17 : vector<8x1xf32>
    %26 = math.log %19 : vector<8x1xf32>
    %27 = arith.subf %25, %26 : vector<8x1xf32>
    %28 = vector.shape_cast %27 : vector<8x1xf32> to vector<1x8x1xf32>
    %cst_8 = arith.constant dense<0.000000e+00> : vector<1xf32>
    %29 = vector.multi_reduction <add>, %28, %cst_8 [1, 2] : vector<1x8x1xf32> to vector<1xf32>
    %30 = vector.shape_cast %29 : vector<1xf32> to vector<1x1x1xf32>
    %31 = vector.extract %30[0, 0, 0] : f32 from vector<1x1x1xf32>
    %32 = tpu.iota {dimensions = array<i32: 1>} : vector<1x128xi32>
    %c0_i32 = arith.constant 0 : i32
    %33 = vector.broadcast %c0_i32 : i32 to vector<1x128xi32>
    %34 = arith.cmpi eq, %32, %33 : vector<1x128xi32>
    %cst_9 = arith.constant dense<0.000000e+00> : vector<128xf32>
    %35 = vector.multi_reduction <add>, %24, %cst_9 [0] : vector<8x128xf32> to vector<128xf32>
    %36 = vector.shape_cast %35 : vector<128xf32> to vector<1x128xf32>
    %cst_10 = arith.constant 0.000000e+00 : f32
    %37 = vector.broadcast %31 : f32 to vector<1x128xf32>
    %38 = vector.broadcast %cst_10 : f32 to vector<1x128xf32>
    %39 = arith.select %34, %37, %38 : vector<1x128xi1>, vector<1x128xf32>
    %40 = arith.addf %36, %39 : vector<1x128xf32>
    %41 = tpu.iota {dimensions = array<i32: 0>} : vector<8x128xi32>
    %c0_i32_11 = arith.constant 0 : i32
    %42 = vector.broadcast %c0_i32_11 : i32 to vector<8x128xi32>
    %43 = arith.cmpi eq, %41, %42 : vector<8x128xi32>
    %cst_12 = arith.constant 0.000000e+00 : f32
    %44 = vector.shape_cast %40 : vector<1x128xf32> to vector<1x128xf32>
    %45 = vector.broadcast %44 : vector<1x128xf32> to vector<8x128xf32>
    %46 = vector.broadcast %cst_12 : f32 to vector<8x128xf32>
    %47 = arith.select %43, %45, %46 : vector<8x128xi1>, vector<8x128xf32>
    %c0_13 = arith.constant 0 : index
    %c0_14 = arith.constant 0 : index
    %48 = vector.load %arg3[%c0_13, %c0_14] : memref<8x128xf32, #tpu.memory_space<vmem>>, vector<8x128xf32>
    tpu.vector_store %arg3[%c0_13, %c0_14], %47 {strides = array<i32>} : memref<8x128xf32, #tpu.memory_space<vmem>>, vector<8x128xf32>,
    return
  }
  func.func @transform_0(%arg0: i32) -> (i32, i32) {
    %c0_i32 = arith.constant 0 : i32
    %c0_i32_0 = arith.constant 0 : i32
    return %arg0, %c0_i32 : i32, i32
  }
  func.func @transform_1(%arg0: i32) -> (i32, i32) {
    %c0_i32 = arith.constant 0 : i32
    %c0_i32_0 = arith.constant 0 : i32
    return %arg0, %c0_i32 : i32, i32
  }
  func.func @transform_2(%arg0: i32) -> (i32, i32) {
    %c0_i32 = arith.constant 0 : i32
    %c0_i32_0 = arith.constant 0 : i32
    return %arg0, %c0_i32 : i32, i32
  }
}

</mosaic_0001>

<llo_original>
// kernel: tpu_custom_call.1
$region0: #{tpu_custom_call.1}
  #allocation0 [shape = 'u32[]', space=smem, size = 0x4, offset = 0x4, fixed_abs, tag = 'smem constant byte address 0x4 - core index']
  #allocation1 [shape = 'u32[72,128]{1,0:T(1,128)}', space=vmem, size = 0x9000, scoped, tag = 'internal scratch']
  %s0 = inlined_call_operand.hbm [shape: f32[16,128], index: 0, kind: input, shape index: {}]
  %s1 = inlined_call_operand.hbm [shape: f32[16,128], index: 1, kind: input, shape index: {}]
  %s2 = inlined_call_operand.hbm [shape: f32[16,128], index: 2, kind: output, shape index: {}]
  %s3 = sld [smem:[#allocation0]]
  $region49: #{tpu_custom_call.1} parent=0
    _
  %s5 = ssub.s32 1, %s3
  %s6 = scalar_select 0, %s5, %s3
  $region1: #{tpu_custom_call.1} parent=0
    #allocation2 [shape = 'u8[8192]{0}', space=vmem, size = 0x2000, scoped, tag = 'input window, operand 0']
    #allocation3 [shape = 's32[2]{0}', space=sflag, size = 0x8, scoped, tag = 'scoped memory for tpu_custom_call.1']
    #allocation4 [shape = 's32[2]{0}', space=sflag, size = 0x8, scoped, tag = 'scoped memory for tpu_custom_call.1']
    #allocation5 [shape = 'u8[8192]{0}', space=vmem, size = 0x2000, scoped, tag = 'input window, operand 1']
    #allocation6 [shape = 's32[2]{0}', space=sflag, size = 0x8, scoped, tag = 'scoped memory for tpu_custom_call.1']
    #allocation7 [shape = 'u8[8192]{0}', space=vmem, size = 0x2000, scoped, tag = 'output window, operand 0']
    %7 = vsyncpa [#allocation3], 0
    %s8 = scalar_lea.sflag [#allocation3], 1
    %9 = vsyncpa %s8, 0
    %10 = vsyncpa [#allocation6], 0
    %s11 = scalar_lea.sflag [#allocation6], 1
    %12 = vsyncpa %s11, 0
    %13 = vsyncpa [#allocation4], 0
    %s14 = scalar_lea.sflag [#allocation4], 1
    %15 = vsyncpa %s14, 0
    loop: start=0, step=1, limit=4
    $region2: #{tpu_custom_call.1} parent=1 // loop_pre_header
      _
    $region3: #{tpu_custom_call.1} parent=1 // loop_header
      %s17 = sphi 0, %s21
      %p18 = scmp.ge.s32.totalorder %s17, 4
      %s27 = sphi 0, %s29
      %s30 = sphi 0, %s27
      %s31 = sphi 0, %s30
      %s47 = sphi 0, %s31
      %s53 = sphi 0, %s55
      %s56 = sphi 0, %s53
      %s57 = sphi 0, %s56
      %s73 = sphi 0, %s57
      %s79 = sphi 0, %s81
      %s82 = sphi 0, %s79
      %s83 = sphi 0, %s82
      %s99 = sphi 0, %s83
    $region4: #{tpu_custom_call.1} parent=1 // loop_header_branch
      %20 = sbr.rel (%p18) target = $region8
    $region5: #{tpu_custom_call.1} parent=1 // loop_body
      %s22 = ssub.s32 %s17, 1
      %s23 = ssub.s32 %s17, 2
      %s24 = sadd.s32 %s17, 1
      %s25 = ssub.s32 %s17, %s24
      %p26 = scmp.eq.s32.totalorder %s25, 0
      %s28 = sadd.s32 %s27, 1
      %s29 = scalar_select %p26, %s27, %s28
      %p32 = pneg %p26
      %p33 = scmp.eq.s32.totalorder %s17, 1
      %p34 = por %p32, %p33
      %p35 = scmp.ne.s32.totalorder %s27, %s30
      %p36 = scmp.eq.s32.totalorder %s17, 0
      %p37 = por %p35, %p36
      %p38 = scmp.ne.s32.totalorder %s27, %s30
      %p39 = scmp.eq.s32.totalorder %s22, 1
      %p40 = por %p38, %p39
      %p41 = scmp.ne.s32.totalorder %s30, %s31
      %p42 = scmp.eq.s32.totalorder %s22, 0
      %p43 = por %p41, %p42
      %p44 = scmp.ne.s32.totalorder %s30, %s31
      %p45 = scmp.eq.s32.totalorder %s23, 1
      %p46 = por %p44, %p45
      %p48 = scmp.ne.s32.totalorder %s31, %s47
      %p49 = scmp.eq.s32.totalorder %s23, 0
      %p50 = por %p48, %p49
      %s51 = ssub.s32 %s17, %s24
      %p52 = scmp.eq.s32.totalorder %s51, 0
      %s54 = sadd.s32 %s53, 1
      %s55 = scalar_select %p52, %s53, %s54
      %p58 = pneg %p52
      %p59 = scmp.eq.s32.totalorder %s17, 1
      %p60 = por %p58, %p59
      %p61 = scmp.ne.s32.totalorder %s53, %s56
      %p62 = scmp.eq.s32.totalorder %s17, 0
      %p63 = por %p61, %p62
      %p64 = scmp.ne.s32.totalorder %s53, %s56
      %p65 = scmp.eq.s32.totalorder %s22, 1
      %p66 = por %p64, %p65
      %p67 = scmp.ne.s32.totalorder %s56, %s57
      %p68 = scmp.eq.s32.totalorder %s22, 0
      %p69 = por %p67, %p68
      %p70 = scmp.ne.s32.totalorder %s56, %s57
      %p71 = scmp.eq.s32.totalorder %s23, 1
      %p72 = por %p70, %p71
      %p74 = scmp.ne.s32.totalorder %s57, %s73
      %p75 = scmp.eq.s32.totalorder %s23, 0
      %p76 = por %p74, %p75
      %s77 = ssub.s32 %s17, %s24
      %p78 = scmp.eq.s32.totalorder %s77, 0
      %s80 = sadd.s32 %s79, 1
      %s81 = scalar_select %p78, %s79, %s80
      %p84 = pneg %p78
      %p85 = scmp.eq.s32.totalorder %s17, 1
      %p86 = por %p84, %p85
      %p87 = scmp.ne.s32.totalorder %s79, %s82
      %p88 = scmp.eq.s32.totalorder %s17, 0
      %p89 = por %p87, %p88
      %p90 = scmp.ne.s32.totalorder %s79, %s82
      %p91 = scmp.eq.s32.totalorder %s22, 1
      %p92 = por %p90, %p91
      %p93 = scmp.ne.s32.totalorder %s82, %s83
      %p94 = scmp.eq.s32.totalorder %s22, 0
      %p95 = por %p93, %p94
      %p96 = scmp.ne.s32.totalorder %s82, %s83
      %p97 = scmp.eq.s32.totalorder %s23, 1
      %p98 = por %p96, %p97
      %p100 = scmp.ne.s32.totalorder %s83, %s99
      %p101 = scmp.eq.s32.totalorder %s23, 0
      %p102 = por %p100, %p101
      %p103 = scmp.le.s32.totalorder 1, %s17
      %p104 = scmp.lt.s32.totalorder %s17, 3
      %p105 = pnand %p103, %p104
      %p106 = pneg %p105
      // Predicated region
      $region9: #{tpu_custom_call.1} parent=5 // pred_check
        _
      $region10: #{tpu_custom_call.1} parent=5 // pred_check_branch
        %108 = sbr.rel (%p105) target = $region12
      $region11: #{tpu_custom_call.1} parent=5 // pred_region
        %s109 = ssub.s32 %s17, 1
      $region12: #{tpu_custom_call.1} parent=5 // pred_fallthru
        _
      %p110 = scmp.lt.s32.totalorder %s17, 2
      // Predicated region
      $region13: #{tpu_custom_call.1} parent=5 // pred_check
        %p111 = pneg %p110
      $region14: #{tpu_custom_call.1} parent=5 // pred_check_branch
        %113 = sbr.rel (%p111) target = $region16
      $region15: #{tpu_custom_call.1} parent=5 // pred_region
        // Predicated region
        $region17: #{tpu_custom_call.1} parent=15 // pred_check
          %p114 = pneg %p37
        $region18: #{tpu_custom_call.1} parent=15 // pred_check_branch
          %116 = sbr.rel (%p114) target = $region20
        $region19: #{tpu_custom_call.1} parent=15 // pred_region
          %s117 = sand.u32 %s27, 1
          %s118 = scalar_lea.sflag [#allocation3], %s117
          %s119 = sand.u32 %s27, 1
          %s120 = smul.addr %s119, 8
          %s121 = scalar_lea.vmem [#allocation2], %s120
          %123 = vsyncadd %s118, 0
          %s124 = smul.addr %s17, 8
          %s125 = scalar_lea.hbm %s0, %s124
          %s127 = sshll.u32 %s125, 4
          %s128 = int_to_ptr.hbm [resolvable:$true] %s127
          %s129 = sshll.u32 %s121, 4
          %s130 = int_to_ptr.vmem [resolvable:$true] %s129
          %132 = dma.hbm_to_vmem [thread:$0]  %s128, 128, %s130, %s118
        $region20: #{tpu_custom_call.1} parent=15 // pred_fallthru
          _
        // Predicated region
        $region21: #{tpu_custom_call.1} parent=15 // pred_check
          %p133 = pneg %p63
        $region22: #{tpu_custom_call.1} parent=15 // pred_check_branch
          %135 = sbr.rel (%p133) target = $region24
        $region23: #{tpu_custom_call.1} parent=15 // pred_region
          %s136 = sand.u32 %s53, 1
          %s137 = scalar_lea.sflag [#allocation6], %s136
          %s138 = sand.u32 %s53, 1
          %s139 = smul.addr %s138, 8
          %s140 = scalar_lea.vmem [#allocation5], %s139
          %142 = vsyncadd %s137, 0
          %s143 = smul.addr %s17, 8
          %s144 = scalar_lea.hbm %s1, %s143
          %s146 = sshll.u32 %s144, 4
          %s147 = int_to_ptr.hbm [resolvable:$true] %s146
          %s148 = sshll.u32 %s140, 4
          %s149 = int_to_ptr.vmem [resolvable:$true] %s148
          %151 = dma.hbm_to_vmem [thread:$0]  %s147, 128, %s149, %s137
        $region24: #{tpu_custom_call.1} parent=15 // pred_fallthru
          _
      $region16: #{tpu_custom_call.1} parent=5 // pred_fallthru
        _
      %p152 = scmp.le.s32.totalorder 1, %s17
      %p153 = scmp.lt.s32.totalorder %s17, 3
      %p154 = pnand %p152, %p153
      %p155 = pneg %p154
      // Predicated region
      $region25: #{tpu_custom_call.1} parent=5 // pred_check
        _
      $region26: #{tpu_custom_call.1} parent=5 // pred_check_branch
        %157 = sbr.rel (%p154) target = $region28
      $region27: #{tpu_custom_call.1} parent=5 // pred_region
        %s158 = ssub.s32 %s17, 1
        %s159 = sand.u32 %s30, 1
        %s160 = scalar_lea.sflag [#allocation3], %s159
        %s161 = sand.u32 %s30, 1
        %s162 = smul.addr %s161, 8
        %s163 = scalar_lea.vmem [#allocation2], %s162
        // Predicated region
        $region29: #{tpu_custom_call.1} parent=27 // pred_check
          %p164 = pneg %p43
        $region30: #{tpu_custom_call.1} parent=27 // pred_check_branch
          %166 = sbr.rel (%p164) target = $region32
        $region31: #{tpu_custom_call.1} parent=27 // pred_region
          %168 = dma.done %s160, 128
        $region32: #{tpu_custom_call.1} parent=27 // pred_fallthru
          _
        %s169 = sand.u32 %s56, 1
        %s170 = scalar_lea.sflag [#allocation6], %s169
        %s171 = sand.u32 %s56, 1
        %s172 = smul.addr %s171, 8
        %s173 = scalar_lea.vmem [#allocation5], %s172
        // Predicated region
        $region33: #{tpu_custom_call.1} parent=27 // pred_check
          %p174 = pneg %p69
        $region34: #{tpu_custom_call.1} parent=27 // pred_check_branch
          %176 = sbr.rel (%p174) target = $region36
        $region35: #{tpu_custom_call.1} parent=27 // pred_region
          %178 = dma.done %s170, 128
        $region36: #{tpu_custom_call.1} parent=27 // pred_fallthru
          _
        %s179 = sand.u32 %s30, 1
        %s180 = scalar_lea.sflag [#allocation3], %s179
        %s181 = sand.u32 %s30, 1
        %s182 = smul.addr %s181, 8
        %s183 = scalar_lea.vmem [#allocation2], %s182
        %p184 = pneg %p43
        %p185 = pneg %p40
        %s186 = sand.u32 %s56, 1
        %s187 = scalar_lea.sflag [#allocation6], %s186
        %s188 = sand.u32 %s56, 1
        %s189 = smul.addr %s188, 8
        %s190 = scalar_lea.vmem [#allocation5], %s189
        %p191 = pneg %p69
        %p192 = pneg %p66
        %p193 = pneg %p95
        %p194 = pneg %p92
        %s195 = sand.u32 %s82, 1
        %s196 = scalar_lea.sflag [#allocation4], %s195
        %s197 = sand.u32 %s82, 1
        %s198 = smul.addr %s197, 8
        %s199 = scalar_lea.vmem [#allocation7], %s198
        %v200 = vld [vmem:[%s163] sm:$0xff]
        %v201 = vld [vmem:[%s173] sm:$0xff]
        %202 = vmax.xlane.f32.xlu0 %v200
        %v203 = vpop.xlane.xlu0 %202
        %v204 = vsub.f32 %v200, %v203
        %v205 = vmul.f32 %v204, 0.5
        %206 = vmax.xlane.f32.xlu0 %v201
        %v207 = vpop.xlane.xlu0 %206
        %v208 = vsub.f32 %v201, %v207
        %v209 = vmul.f32 %v208, 0.5
        %v210 = vmul.f32 %v205, 1.442695
        %v211 = vpow.pop %v210
        %v212 = vmul.f32 %v209, 1.442695
        %v213 = vpow.pop %v212
        %214 = vadd.xlane.f32.xlu0 %v211
        %v215 = vpop.xlane.xlu0 %214
        %216 = vadd.xlane.f32.xlu0 %v213
        %v217 = vpop.xlane.xlu0 %216
        %v218 = vrcp.pop %v217
        %v219 = vmul.f32 %v217, %v218
        %v220 = vsub.f32 1.0, %v219
        %v221 = vmul.f32 %v218, %v220
        %v222 = vadd.f32 %v218, %v221
        %vm223 = vweird.f32 %v217
        %vm224 = vweird.f32 %v218
        %vm225 = vmor %vm223, %vm224
        %v226 = vsel %vm225, %v218, %v222
        %v227 = vand.u32 2147483647, %v217
        %vm228 = vcmp.eq.f32.partialorder %v227, 8.507059e+37
        %v229 = vand.u32 %v217, 2147483648
        %v230 = vor.u32 1.1754944e-38, %v229
        %v231 = vsel %vm228, %v230, %v226
        %v232 = vmul.f32 %v213, %v231
        %v233 = vsub.f32 %v209, %v205
        %v234 = vmul.f32 %v232, %v233
        %v235 = vlog2.pop %v215
        %v236 = vmul.f32 %v235, 0.6931472
        %v237 = vlog2.pop %v217
        %v238 = vmul.f32 %v237, 0.6931472
        %v239 = vsub.f32 %v236, %v238
        %vm240 = vcmask 7168
        %v241 = vsel %vm240, %v239, 0.0
        %242 = vadd.xlane.f32.xlu0 %v241
        %v243 = vpop.xlane.xlu0 %242
        %v244 = vrot.slane %v243, 4
        %v245 = vadd.f32 %v243, %v244
        %v246 = vrot.slane %v245, 2
        %v247 = vadd.f32 %v245, %v246
        %v248 = vrot.slane %v247, 1
        %v249 = vadd.f32 %v247, %v248
        %s250 = vtos %v249
        %v251 = vlaneseq
        %v252 = vand.u32 %v251, 127
        %vm253 = vcmp.eq.s32.totalorder %v252, 0
        %v254 = vrot.slane %v234, 4
        %v255 = vadd.f32 %v234, %v254
        %v256 = vrot.slane %v255, 2
        %v257 = vadd.f32 %v255, %v256
        %v258 = vrot.slane %v257, 1
        %v259 = vadd.f32 %v257, %v258
        %v260 = vstv %s250
        %v261 = vsel %vm253, %v260, 0.0
        %v262 = vadd.f32 %v259, %v261
        %v263 = vlaneseq
        %v264 = vshrl.u32 %v263, 7
        %vm265 = vcmp.eq.s32.totalorder %v264, 0
        %v266 = vsel %vm265, %v262, 0.0
        %267 = vst [vmem:[%s199] sm:$0xff] %v266
        %s268 = sand.u32 %s82, 1
        %s269 = scalar_lea.sflag [#allocation4], %s268
        %s270 = sand.u32 %s82, 1
        %s271 = smul.addr %s270, 8
        %s272 = scalar_lea.vmem [#allocation7], %s271
        // Predicated region
        $region37: #{tpu_custom_call.1} parent=27 // pred_check
          %p273 = pneg %p92
        $region38: #{tpu_custom_call.1} parent=27 // pred_check_branch
          %275 = sbr.rel (%p273) target = $region40
        $region39: #{tpu_custom_call.1} parent=27 // pred_region
          %277 = vsyncadd %s269, 0
          %s278 = smul.addr %s22, 8
          %s279 = scalar_lea.hbm %s2, %s278
          %s281 = sshll.u32 %s272, 4
          %s282 = int_to_ptr.vmem [resolvable:$true] %s281
          %s283 = sshll.u32 %s279, 4
          %s284 = int_to_ptr.hbm [resolvable:$true] %s283
          %286 = dma.vmem_to_hbm [thread:$0]  %s282, 128, %s284, %s269
        $region40: #{tpu_custom_call.1} parent=27 // pred_fallthru
          _
      $region28: #{tpu_custom_call.1} parent=5 // pred_fallthru
        _
      %p287 = scmp.le.s32.totalorder 2, %s17
      // Predicated region
      $region41: #{tpu_custom_call.1} parent=5 // pred_check
        %p288 = pneg %p287
      $region42: #{tpu_custom_call.1} parent=5 // pred_check_branch
        %290 = sbr.rel (%p288) target = $region44
      $region43: #{tpu_custom_call.1} parent=5 // pred_region
        %s291 = ssub.s32 %s17, 2
        // Predicated region
        $region45: #{tpu_custom_call.1} parent=43 // pred_check
          %p292 = pneg %p98
        $region46: #{tpu_custom_call.1} parent=43 // pred_check_branch
          %294 = sbr.rel (%p292) target = $region48
        $region47: #{tpu_custom_call.1} parent=43 // pred_region
          %s295 = sand.u32 %s83, 1
          %s296 = scalar_lea.sflag [#allocation4], %s295
          %s297 = sand.u32 %s83, 1
          %s298 = smul.addr %s297, 8
          %s299 = scalar_lea.vmem [#allocation7], %s298
          %301 = dma.done %s296, 128
        $region48: #{tpu_custom_call.1} parent=43 // pred_fallthru
          _
      $region44: #{tpu_custom_call.1} parent=5 // pred_fallthru
        _
    $region6: #{tpu_custom_call.1} parent=1 // loop_footer
      %s21 = sadd.s32 1, %s17
    $region7: #{tpu_custom_call.1} parent=1 // loop_footer_branch
      %16 = sbr.rel target = $region3
    $region8: #{tpu_custom_call.1} parent=1 // loop_exit
      _
    %302 = vsyncpa [#allocation3], 1
    %s303 = scalar_lea.sflag [#allocation3], 1
    %304 = vsyncpa %s303, 1
    %305 = vsyncpa [#allocation6], 1
    %s306 = scalar_lea.sflag [#allocation6], 1
    %307 = vsyncpa %s306, 1
    %308 = vsyncpa [#allocation4], 1
    %s309 = scalar_lea.sflag [#allocation4], 1
    %310 = vsyncpa %s309, 1

</llo_original>
